<compile_context>
chip_gen: v6e
topology: v6e:2x2x1
jax: 0.10.0
libtpu: 0.0.40
codegen_flags: <defaults>
</compile_context>

<pallas_src>
import functools

import jax
import jax.numpy as jnp
from jax.experimental import pallas as pl
from jax.experimental.pallas import tpu as pltpu

_LANE = 128
_SUBLANE = 8


def _iou_kernel(logits_ref, mask_ref, loss_ref, inter_acc, union_acc, *, eps):
    k = pl.program_id(1)  # column (reduction) axis — last grid axis

    @pl.when(k == 0)
    def _():
        inter_acc[...] = jnp.zeros_like(inter_acc)
        union_acc[...] = jnp.zeros_like(union_acc)

    pred = jax.nn.sigmoid(logits_ref[...].astype(jnp.float32))
    m = mask_ref[...].astype(jnp.float32)

    inter = pred * m
    # Wide accumulation: pure elementwise VPU adds, unmasked lane-dense stores.
    inter_acc[...] += inter
    union_acc[...] += pred + m - inter

    @pl.when(k == pl.num_programs(1) - 1)
    def _():
        # Single cross-lane (XLU) reduction in the epilogue.
        inter_sum = inter_acc[...].sum(axis=1, keepdims=True)
        union_sum = union_acc[...].sum(axis=1, keepdims=True)
        loss_ref[...] = 1.0 - (inter_sum + eps) / (union_sum + eps)


def _round_up(x, m):
    return ((x + m - 1) // m) * m


def _pick_tile(total, step, cap):
    """Largest multiple of `step` that divides `total`, capped at `cap`."""
    t = min(total, _round_up(cap, step) if cap % step else cap)
    t = (t // step) * step
    t = max(t, step)
    while total % t != 0:
        t -= step
    return t


def iou_loss(logits, mask, *, eps=1e-6, reduction="avg",
             max_row_tile=256, max_col_tile=2048):
    """Pallas implementation of IOULoss.forward.

    logits, mask: (B, C, H, W). Returns scalar (avg/sum) or (B, C) loss (None).
    """
    assert reduction in ("avg", "sum", None)
    B, C, H, W = logits.shape
    rows = B * C
    hw = H * W

    logits2d = logits.reshape(rows, hw)
    # Mask is binary -> bfloat16 is lossless and cuts HBM traffic for the mask
    # stream in half.
    mask2d = mask.reshape(rows, hw).astype(jnp.bfloat16)

    # Pad the spatial dim up to a multiple of 128 lanes so we always stay on
    # the tiled / pipelined path. Padded logits are a large negative value
    # (sigmoid -> 0) and padded mask is 0, so the padding contributes nothing
    # to intersection or union.
    hw_pad = _round_up(hw, _LANE)
    if hw_pad != hw:
        logits2d = jnp.pad(logits2d, ((0, 0), (0, hw_pad - hw)),
                           constant_values=-1e9)
        mask2d = jnp.pad(mask2d, ((0, 0), (0, hw_pad - hw)),
                         constant_values=0)

    # Pad rows to a multiple of 8 sublanes; padded rows are sliced away below.
    rows_pad = _round_up(rows, _SUBLANE)
    if rows_pad != rows:
        logits2d = jnp.pad(logits2d, ((0, rows_pad - rows), (0, 0)),
                           constant_values=-1e9)
        mask2d = jnp.pad(mask2d, ((0, rows_pad - rows), (0, 0)),
                         constant_values=0)

    col_tile = _pick_tile(hw_pad, _LANE, max_col_tile)
    row_tile = _pick_tile(rows_pad, _SUBLANE, max_row_tile)
    n_row_tiles = rows_pad // row_tile
    n_col_tiles = hw_pad // col_tile

    kernel = functools.partial(_iou_kernel, eps=eps)

    per_row_loss = pl.pallas_call(
        kernel,
        out_shape=jax.ShapeDtypeStruct((rows_pad, 1), jnp.float32),
        grid_spec=pltpu.PrefetchScalarGridSpec(
            num_scalar_prefetch=0,
            # Row axis is independent (parallel -> sharded across TCs on v7x);
            # column axis is the reduction and stays last (arbitrary).
            grid=(n_row_tiles, n_col_tiles),
            in_specs=[
                pl.BlockSpec((row_tile, col_tile), lambda i, k: (i, k)),
                pl.BlockSpec((row_tile, col_tile), lambda i, k: (i, k)),
            ],
            out_specs=pl.BlockSpec((row_tile, 1), lambda i, k: (i, 0)),
            scratch_shapes=[
                pltpu.VMEM((row_tile, col_tile), jnp.float32),  # inter acc
                pltpu.VMEM((row_tile, col_tile), jnp.float32),  # union acc
            ],
        ),
        compiler_params=pltpu.CompilerParams(
            dimension_semantics=("parallel", "arbitrary"),
            # Well above default scoped VMEM (16/32 MiB), with headroom below
            # v7x's 64 MiB physical limit. Max tile footprint here is ~11 MiB.
            vmem_limit_bytes=48 * 1024 * 1024,
        ),
    )(logits2d, mask2d)

    loss = per_row_loss[:rows, 0].reshape(B, C)
    if reduction == "avg":
        return loss.mean()
    elif reduction == "sum":
        return loss.sum()
    return loss


def _ref_iou_loss(logits, mask, eps=1e-6, reduction="avg"):
    pred = jax.nn.sigmoid(logits.astype(jnp.float32))
    mask = mask.astype(jnp.float32)
    B, C = pred.shape[:2]
    inter = (pred * mask).reshape(B, C, -1).sum(-1)
    union = (pred + mask - pred * mask).reshape(B, C, -1).sum(-1)
    loss = 1.0 - (inter + eps) / (union + eps)
    if reduction == "avg":
        return loss.mean()
    elif reduction == "sum":
        return loss.sum()
    return loss


if __name__ == "__main__":
    key = jax.random.PRNGKey(0)
    k1, k2 = jax.random.split(key)

    B, C, H, W = 2, 4, 16, 16
    logits = jax.random.normal(k1, (B, C, H, W), dtype=jnp.float32)
    mask = (jax.random.uniform(k2, (B, C, H, W)) > 0.5).astype(jnp.float32)

    out = iou_loss(logits, mask, eps=1e-6, reduction="avg")
    out = jax.block_until_ready(out)

    ref = _ref_iou_loss(logits, mask, eps=1e-6, reduction="avg")
    assert jnp.allclose(out, ref, atol=1e-5, rtol=1e-5), (out, ref)

    # Also exercise the other reductions on the same data.
    out_sum = jax.block_until_ready(iou_loss(logits, mask, reduction="sum"))
    ref_sum = _ref_iou_loss(logits, mask, reduction="sum")
    assert jnp.allclose(out_sum, ref_sum, atol=1e-5, rtol=1e-5)

    out_none = jax.block_until_ready(iou_loss(logits, mask, reduction=None))
    ref_none = _ref_iou_loss(logits, mask, reduction=None)
    assert jnp.allclose(out_none, ref_none, atol=1e-5, rtol=1e-5)

    print("KERNEL_OK")
</pallas_src>

<mosaic_0001>
module attributes {stable_mosaic.version = 11 : i64} {
  func.func @_iou_kernel(%arg0: i32, %arg1: i32, %arg2: memref<8x256xf32, #tpu.memory_space<vmem>>, %arg3: memref<8x256xbf16, #tpu.memory_space<vmem>>, %arg4: memref<8x1xf32, #tpu.memory_space<vmem>>, %arg5: memref<8x256xf32, #tpu.memory_space<vmem>>, %arg6: memref<8x256xf32, #tpu.memory_space<vmem>>) attributes {dimension_semantics = [#tpu.dimension_semantics<parallel>, #tpu.dimension_semantics<arbitrary>], iteration_bounds = array<i64: 1, 1>, scalar_prefetch = 0 : i64, scratch_operands = 2 : i64, tpu.core_type = #tpu.core_type<tc>, window_params = [{transform_indices = @transform_0, window_bounds = array<i64: 8, 256>}, {transform_indices = @transform_1, window_bounds = array<i64: 8, 256>}, {transform_indices = @transform_2, window_bounds = array<i64: 8, 1>}]} {
    %c0_i32 = arith.constant 0 : i32
    %0 = arith.cmpi eq, %arg1, %c0_i32 : i32
    %1 = arith.extui %0 : i1 to i32
    %c0_i32_0 = arith.constant 0 : i32
    %2 = arith.cmpi ne, %1, %c0_i32_0 : i32
    scf.if %2 {
      %cst_14 = arith.constant 0.000000e+00 : f32
      %23 = vector.broadcast %cst_14 : f32 to vector<8x256xf32>
      %c0_15 = arith.constant 0 : index
      %c0_16 = arith.constant 0 : index
      %24 = vector.load %arg5[%c0_15, %c0_16] : memref<8x256xf32, #tpu.memory_space<vmem>>, vector<8x256xf32>
      tpu.vector_store %arg5[%c0_15, %c0_16], %23 {strides = array<i32>} : memref<8x256xf32, #tpu.memory_space<vmem>>, vector<8x256xf32>,
      %cst_17 = arith.constant 0.000000e+00 : f32
      %25 = vector.broadcast %cst_17 : f32 to vector<8x256xf32>
      %c0_18 = arith.constant 0 : index
      %c0_19 = arith.constant 0 : index
      %26 = vector.load %arg6[%c0_18, %c0_19] : memref<8x256xf32, #tpu.memory_space<vmem>>, vector<8x256xf32>
      tpu.vector_store %arg6[%c0_18, %c0_19], %25 {strides = array<i32>} : memref<8x256xf32, #tpu.memory_space<vmem>>, vector<8x256xf32>,
    } else {
    }
    %c0 = arith.constant 0 : index
    %c0_1 = arith.constant 0 : index
    %3 = vector.load %arg2[%c0, %c0_1] : memref<8x256xf32, #tpu.memory_space<vmem>>, vector<8x256xf32>
    %4 = arith.negf %3 : vector<8x256xf32>
    %5 = math.exp %4 : vector<8x256xf32>
    %cst = arith.constant 1.000000e+00 : f32
    %6 = vector.broadcast %cst : f32 to vector<8x256xf32>
    %7 = arith.addf %6, %5 : vector<8x256xf32>
    %8 = arith.divf %6, %7 : vector<8x256xf32>
    %c0_2 = arith.constant 0 : index
    %c0_3 = arith.constant 0 : index
    %9 = vector.load %arg3[%c0_2, %c0_3] : memref<8x256xbf16, #tpu.memory_space<vmem>>, vector<8x256xbf16>
    %10 = arith.extf %9 : vector<8x256xbf16> to vector<8x256xf32>
    %11 = arith.mulf %8, %10 : vector<8x256xf32>
    %c0_4 = arith.constant 0 : index
    %c0_5 = arith.constant 0 : index
    %12 = vector.load %arg5[%c0_4, %c0_5] : memref<8x256xf32, #tpu.memory_space<vmem>>, vector<8x256xf32>
    %13 = arith.addf %12, %11 : vector<8x256xf32>
    %c0_6 = arith.constant 0 : index
    %c0_7 = arith.constant 0 : index
    %14 = vector.load %arg5[%c0_6, %c0_7] : memref<8x256xf32, #tpu.memory_space<vmem>>, vector<8x256xf32>
    tpu.vector_store %arg5[%c0_6, %c0_7], %13 {strides = array<i32>} : memref<8x256xf32, #tpu.memory_space<vmem>>, vector<8x256xf32>,
    %c0_8 = arith.constant 0 : index
    %c0_9 = arith.constant 0 : index
    %15 = vector.load %arg6[%c0_8, %c0_9] : memref<8x256xf32, #tpu.memory_space<vmem>>, vector<8x256xf32>
    %16 = arith.addf %8, %10 : vector<8x256xf32>
    %17 = arith.subf %16, %11 : vector<8x256xf32>
    %18 = arith.addf %15, %17 : vector<8x256xf32>
    %c0_10 = arith.constant 0 : index
    %c0_11 = arith.constant 0 : index
    %19 = vector.load %arg6[%c0_10, %c0_11] : memref<8x256xf32, #tpu.memory_space<vmem>>, vector<8x256xf32>
    tpu.vector_store %arg6[%c0_10, %c0_11], %18 {strides = array<i32>} : memref<8x256xf32, #tpu.memory_space<vmem>>, vector<8x256xf32>,
    %c0_i32_12 = arith.constant 0 : i32
    %20 = arith.cmpi eq, %arg1, %c0_i32_12 : i32
    %21 = arith.extui %20 : i1 to i32
    %c0_i32_13 = arith.constant 0 : i32
    %22 = arith.cmpi ne, %21, %c0_i32_13 : i32
    scf.if %22 {
      %c0_14 = arith.constant 0 : index
      %c0_15 = arith.constant 0 : index
      %23 = vector.load %arg5[%c0_14, %c0_15] : memref<8x256xf32, #tpu.memory_space<vmem>>, vector<8x256xf32>
      %cst_16 = arith.constant dense<0.000000e+00> : vector<8xf32>
      %24 = vector.multi_reduction <add>, %23, %cst_16 [1] : vector<8x256xf32> to vector<8xf32>
      %25 = vector.shape_cast %24 : vector<8xf32> to vector<8x1xf32>
      %c0_17 = arith.constant 0 : index
      %c0_18 = arith.constant 0 : index
      %26 = vector.load %arg6[%c0_17, %c0_18] : memref<8x256xf32, #tpu.memory_space<vmem>>, vector<8x256xf32>
      %cst_19 = arith.constant dense<0.000000e+00> : vector<8xf32>
      %27 = vector.multi_reduction <add>, %26, %cst_19 [1] : vector<8x256xf32> to vector<8xf32>
      %28 = vector.shape_cast %27 : vector<8xf32> to vector<8x1xf32>
      %cst_20 = arith.constant 9.99999997E-7 : f32
      %29 = vector.broadcast %cst_20 : f32 to vector<8x1xf32>
      %30 = arith.addf %25, %29 : vector<8x1xf32>
      %cst_21 = arith.constant 9.99999997E-7 : f32
      %31 = vector.broadcast %cst_21 : f32 to vector<8x1xf32>
      %32 = arith.addf %28, %31 : vector<8x1xf32>
      %33 = arith.divf %30, %32 : vector<8x1xf32>
      %cst_22 = arith.constant 1.000000e+00 : f32
      %34 = vector.broadcast %cst_22 : f32 to vector<8x1xf32>
      %35 = arith.subf %34, %33 : vector<8x1xf32>
      %c0_23 = arith.constant 0 : index
      %c0_24 = arith.constant 0 : index
      %36 = vector.load %arg4[%c0_23, %c0_24] : memref<8x1xf32, #tpu.memory_space<vmem>>, vector<8x1xf32>
      tpu.vector_store %arg4[%c0_23, %c0_24], %35 {strides = array<i32>} : memref<8x1xf32, #tpu.memory_space<vmem>>, vector<8x1xf32>,
    } else {
    }
    return
  }
  func.func @transform_0(%arg0: i32, %arg1: i32) -> (i32, i32) {
    %c0_i32 = arith.constant 0 : i32
    return %arg0, %arg1 : i32, i32
  }
  func.func @transform_1(%arg0: i32, %arg1: i32) -> (i32, i32) {
    %c0_i32 = arith.constant 0 : i32
    return %arg0, %arg1 : i32, i32
  }
  func.func @transform_2(%arg0: i32, %arg1: i32) -> (i32, i32) {
    %c0_i32 = arith.constant 0 : i32
    %c0_i32_0 = arith.constant 0 : i32
    return %arg0, %c0_i32 : i32, i32
  }
}

</mosaic_0001>

<llo_original>
// kernel: tpu_custom_call.1
$region0: #{tpu_custom_call.1}
  #allocation0 [shape = 'u32[]', space=smem, size = 0x4, offset = 0x4, fixed_abs, tag = 'smem constant byte address 0x4 - core index']
  #allocation1 [shape = 'u32[144,128]{1,0:T(1,128)}', space=vmem, size = 0x12000, scoped, tag = 'internal scratch']
  #allocation2 [shape = 'f32[8,256]{1,0:T(8,128)}', space=vmem, size = 0x2000, scoped, tag = 'scratch operand']
  #allocation3 [shape = 'f32[8,256]{1,0:T(8,128)}', space=vmem, size = 0x2000, scoped, tag = 'scratch operand']
  %s0 = inlined_call_operand.hbm [shape: f32[8,256], index: 0, kind: input, shape index: {}]
  %s1 = inlined_call_operand.hbm [shape: bf16[8,256], index: 1, kind: input, shape index: {}]
  %s2 = inlined_call_operand.vmem [shape: f32[8,1], index: 2, kind: output, shape index: {}]
  %s3 = sld [smem:[#allocation0]]
  $region34: #{tpu_custom_call.1} parent=0
    _
  %s5 = ssub.s32 1, %s3
  %s6 = scalar_select 0, %s5, %s3
  $region1: #{tpu_custom_call.1} parent=0
    #allocation4 [shape = 'u8[8192]{0}', space=vmem, size = 0x2000, scoped, tag = 'input window, operand 0, single buffered']
    #allocation5 [shape = 's32[1]{0}', space=sflag, size = 0x4, scoped, tag = 'scoped memory for tpu_custom_call.1']
    #allocation6 [shape = 'u8[4096]{0}', space=vmem, size = 0x1000, scoped, tag = 'input window, operand 1, single buffered']
    #allocation7 [shape = 's32[1]{0}', space=sflag, size = 0x4, scoped, tag = 'scoped memory for tpu_custom_call.1']
    %7 = vsyncpa [#allocation5], 0
    %8 = vsyncpa [#allocation7], 0
    // Predicated region
    $region2: #{tpu_custom_call.1} parent=1 // pred_check
      _
    $region3: #{tpu_custom_call.1} parent=1 // pred_check_branch
      %10 = sbr.rel (0) target = $region5
    $region4: #{tpu_custom_call.1} parent=1 // pred_region
      %s12 = ssub.s32 256, 256
      %13 = vsyncadd [#allocation5], %s12
      %s15 = sshll.u32 [#allocation4], 4
      %s16 = int_to_ptr.vmem [resolvable:$true] %s15
      %18 = dma.hbm_to_vmem [thread:$0]  %s0, 256, %s16, [#allocation5]
    $region5: #{tpu_custom_call.1} parent=1 // pred_fallthru
      _
    // Predicated region
    $region6: #{tpu_custom_call.1} parent=1 // pred_check
      _
    $region7: #{tpu_custom_call.1} parent=1 // pred_check_branch
      %20 = sbr.rel (0) target = $region9
    $region8: #{tpu_custom_call.1} parent=1 // pred_region
      %s22 = ssub.s32 128, 128
      %23 = vsyncadd [#allocation7], %s22
      %s25 = sshll.u32 [#allocation6], 4
      %s26 = int_to_ptr.vmem [resolvable:$true] %s25
      %28 = dma.hbm_to_vmem [thread:$0]  %s1, 128, %s26, [#allocation7]
    $region9: #{tpu_custom_call.1} parent=1 // pred_fallthru
      _
    // Predicated region
    $region10: #{tpu_custom_call.1} parent=1 // pred_check
      _
    $region11: #{tpu_custom_call.1} parent=1 // pred_check_branch
      %30 = sbr.rel (0) target = $region13
    $region12: #{tpu_custom_call.1} parent=1 // pred_region
      %31 = dma.done [#allocation5], 256
    $region13: #{tpu_custom_call.1} parent=1 // pred_fallthru
      _
    // Predicated region
    $region14: #{tpu_custom_call.1} parent=1 // pred_check
      _
    $region15: #{tpu_custom_call.1} parent=1 // pred_check_branch
      %33 = sbr.rel (0) target = $region17
    $region16: #{tpu_custom_call.1} parent=1 // pred_region
      %34 = dma.done [#allocation7], 128
    $region17: #{tpu_custom_call.1} parent=1 // pred_fallthru
      _
    %p35 = scmp.eq.s32.totalorder 0, 0
    // Predicated region
    $region18: #{tpu_custom_call.1} parent=1 // pred_check
      %p36 = pneg %p35
    $region19: #{tpu_custom_call.1} parent=1 // pred_check_branch
      %38 = sbr.rel (%p36) target = $region21
    $region20: #{tpu_custom_call.1} parent=1 // pred_region
      %39 = vst [vmem:[#allocation2] sm:$0xff] 0.0
      %40 = vst [vmem:[#allocation2 + $0x8] sm:$0xff] 0.0
      %41 = vst [vmem:[#allocation3] sm:$0xff] 0.0
      %42 = vst [vmem:[#allocation3 + $0x8] sm:$0xff] 0.0
    $region21: #{tpu_custom_call.1} parent=1 // pred_fallthru
      _
    %v43 = vld [vmem:[#allocation4] sm:$0xff]
    %v44 = vld [vmem:[#allocation4 + $0x8] sm:$0xff]
    %v45 = vxor.u32 %v43, 2147483648
    %v46 = vxor.u32 %v44, 2147483648
    %v47 = vmul.f32 %v45, 1.442695
    %v48 = vpow.pop %v47
    %v49 = vmul.f32 %v46, 1.442695
    %v50 = vpow.pop %v49
    %v51 = vadd.f32 %v48, 1.0
    %v52 = vadd.f32 %v50, 1.0
    %v53 = vrcp.pop %v51
    %v54 = vmul.f32 1.0, %v53
    %v55 = vrcp.pop %v52
    %v56 = vmul.f32 1.0, %v55
    %v57 = vld [vmem:[#allocation6] sm:$0xff]
    %v58 = vunpack.c.l.bf16 %v57
    %v59 = vunpack.c.h.bf16 %v57
    %v60 = vmul.f32 %v54, %v58
    %v61 = vmul.f32 %v56, %v59
    %v62 = vld [vmem:[#allocation2] sm:$0xff]
    %v63 = vld [vmem:[#allocation2 + $0x8] sm:$0xff]
    %v64 = vadd.f32 %v62, %v60
    %v65 = vadd.f32 %v63, %v61
    %66 = vst [vmem:[#allocation2] sm:$0xff] %v64
    %67 = vst [vmem:[#allocation2 + $0x8] sm:$0xff] %v65
    %v68 = vld [vmem:[#allocation3] sm:$0xff]
    %v69 = vld [vmem:[#allocation3 + $0x8] sm:$0xff]
    %v70 = vadd.f32 %v54, %v58
    %v71 = vadd.f32 %v56, %v59
    %v72 = vsub.f32 %v70, %v60
    %v73 = vsub.f32 %v71, %v61
    %v74 = vadd.f32 %v68, %v72
    %v75 = vadd.f32 %v69, %v73
    %76 = vst [vmem:[#allocation3] sm:$0xff] %v74
    %77 = vst [vmem:[#allocation3 + $0x8] sm:$0xff] %v75
    // Predicated region
    $region22: #{tpu_custom_call.1} parent=1 // pred_check
      %p78 = pneg %p35
    $region23: #{tpu_custom_call.1} parent=1 // pred_check_branch
      %80 = sbr.rel (%p78) target = $region25
    $region24: #{tpu_custom_call.1} parent=1 // pred_region
      %v81 = vld [vmem:[#allocation2] sm:$0xff]
      %v82 = vld [vmem:[#allocation2 + $0x8] sm:$0xff]
      %v83 = vadd.f32 %v81, %v82
      %84 = vadd.xlane.f32.xlu0 %v83
      %v85 = vpop.xlane.xlu0 %84
      %v86 = vld [vmem:[#allocation3] sm:$0xff]
      %v87 = vld [vmem:[#allocation3 + $0x8] sm:$0xff]
      %v88 = vadd.f32 %v86, %v87
      %89 = vadd.xlane.f32.xlu0 %v88
      %v90 = vpop.xlane.xlu0 %89
      %v91 = vadd.f32 %v85, 1e-06
      %v92 = vadd.f32 %v90, 1e-06
      %v93 = vrcp.pop %v92
      %v94 = vmul.f32 %v91, %v93
      %v95 = vsub.f32 1.0, %v94
      %vm96 = vcmask 7168
      %97 = vst.msk [vmem:[%s2] sm:$0xff] %vm96, %v95
    $region25: #{tpu_custom_call.1} parent=1 // pred_fallthru
      _
    // Predicated region
    $region26: #{tpu_custom_call.1} parent=1 // pred_check
      _
    $region27: #{tpu_custom_call.1} parent=1 // pred_check_branch
      %99 = sbr.rel (0) target = $region29
    $region28: #{tpu_custom_call.1} parent=1 // pred_region
      _
    $region29: #{tpu_custom_call.1} parent=1 // pred_fallthru
      _
    // Predicated region
    $region30: #{tpu_custom_call.1} parent=1 // pred_check
      _
    $region31: #{tpu_custom_call.1} parent=1 // pred_check_branch
      %101 = sbr.rel (0) target = $region33
    $region32: #{tpu_custom_call.1} parent=1 // pred_region
      _
    $region33: #{tpu_custom_call.1} parent=1 // pred_fallthru
      _
    %102 = vsyncpa [#allocation5], 1
    %103 = vsyncpa [#allocation7], 1

</llo_original>
